<compile_context>
chip_gen: v7x
topology: tpu7x:2x2x1
jax: 0.10.0
libtpu: 0.0.40
codegen_flags: <defaults>
</compile_context>

<pallas_src>
import jax
import jax.numpy as jnp
from jax.experimental import pallas as pl
from jax.experimental.pallas import tpu as pltpu

LANE = 128
SUBLANE = 8


def _round_up(x, m):
    return (x + m - 1) // m * m


def _make_fused_mlp_kernel(n_padded):
    """refs = (x, b_all, w0, w1, ..., w_{L-1}, out)."""
    num_layers = len(n_padded)

    def kernel(x_ref, b_all_ref, *rest):
        w_refs = rest[:num_layers]
        out_ref = rest[num_layers]

        h = x_ref[...]                                   # bf16 (tm, D0)
        for i in range(num_layers):
            n_p = n_padded[i]
            # bf16 MXU inputs, f32 accumulation; epilogue stays f32.
            y = jnp.dot(h, w_refs[i][...], preferred_element_type=jnp.float32)
            y = y + b_all_ref[i:i + 1, :n_p]             # (tm,N) + (1,N), f32
            if i == num_layers - 1:
                h = jax.nn.sigmoid(y)                    # final Sigmoid, f32
            else:
                h = jnp.maximum(y, 0.0).astype(jnp.bfloat16)   # ReLU -> bf16
        out_ref[...] = h.astype(out_ref.dtype)

    return kernel


def mlp_forward(params, x, *, tm_max=512):
    """Fused MLP forward.  params: list of (W:(K,N) f32, b:(1,N) f32); x:(B,D0)."""
    B, D0 = x.shape
    num_layers = len(params)
    n_out_true = params[-1][0].shape[1]

    # --- lane-dense layers: zero-pad every output width to a multiple of 128.
    w_list, n_padded = [], []
    prev_k = D0
    for (w, _b) in params:
        k, n = w.shape
        n_p = _round_up(max(n, LANE), LANE)
        w_p = jnp.zeros((prev_k, n_p), jnp.float32).at[:k, :n].set(w)
        w_list.append(w_p.astype(jnp.bfloat16))          # bf16 weights from the wrapper
        n_padded.append(n_p)
        prev_k = n_p
    n_last = n_padded[-1]
    max_n = max(n_padded)

    # --- pack all biases into one (L, max_N) f32 block -----------------------
    b_all = jnp.zeros((num_layers, max_n), jnp.float32)
    for i, (_w, b) in enumerate(params):
        b_all = b_all.at[i, : b.shape[-1]].set(b.reshape(-1))

    # --- batch tiling: tm rows per grid step (multiple of 8) -----------------
    tm_cap = _round_up(tm_max, SUBLANE)
    if B >= 16:
        # guarantee >= 2 grid programs so v7x's second TensorCore gets work
        tm_cap = min(tm_cap, _round_up(-(-B // 2), SUBLANE))
    tm = min(tm_cap, _round_up(B, SUBLANE))
    b_pad = _round_up(B, tm)
    x_bf16 = x.astype(jnp.bfloat16)
    if b_pad != B:
        x_bf16 = jnp.zeros((b_pad, D0), jnp.bfloat16).at[:B].set(x_bf16)
    grid = (b_pad // tm,)

    # --- specs: batch-tiled x/out, resident single-buffered weights/biases ---
    resident = pl.Buffered(1)   # constant index_map -> no point double-buffering
    in_specs = [
        pl.BlockSpec((tm, D0), lambda i: (i, 0)),
        pl.BlockSpec((num_layers, max_n), lambda i: (0, 0), pipeline_mode=resident),
    ]
    for w in w_list:
        in_specs.append(pl.BlockSpec(w.shape, lambda i: (0, 0), pipeline_mode=resident))
    out_spec = pl.BlockSpec((tm, n_last), lambda i: (i, 0))

    # --- VMEM footprint -> vmem_limit_bytes -----------------------------------
    weight_bytes = sum(int(w.size) * 2 for w in w_list)            # bf16, 1 buffer
    bias_bytes = _round_up(num_layers, SUBLANE) * max_n * 4        # f32, 1 buffer
    x_bytes = 2 * tm * _round_up(D0, LANE) * 2                     # 2 bufs, bf16
    out_bytes = 2 * tm * n_last * 4                                # 2 bufs, f32
    footprint = weight_bytes + bias_bytes + x_bytes + out_bytes
    # TODO(synk): if weight_bytes alone exceeds ~48 MiB, v7x (64 MiB VMEM) needs a
    # K-tiled weight pipeline (second grid axis / emit_pipeline) instead of
    # fully-resident weights.
    vmem_limit = int(min(100 * 1024 * 1024,
                         max(32 * 1024 * 1024, footprint + 8 * 1024 * 1024)))

    # --- cost estimate ---------------------------------------------------------
    flops = 0
    k_prev = D0
    for n_p in n_padded:
        flops += 2 * b_pad * k_prev * n_p
        k_prev = n_p
    bytes_accessed = (x_bf16.size * 2 + b_all.size * 4 + weight_bytes
                      + b_pad * n_last * 4)
    cost = pl.CostEstimate(flops=flops, transcendentals=b_pad * n_last,
                           bytes_accessed=bytes_accessed)

    out = pl.pallas_call(
        _make_fused_mlp_kernel(tuple(n_padded)),
        out_shape=jax.ShapeDtypeStruct((b_pad, n_last), jnp.float32),
        grid=grid,
        in_specs=in_specs,
        out_specs=out_spec,
        compiler_params=pltpu.CompilerParams(
            dimension_semantics=("parallel",),    # v7x: 2 TCs split the batch
            vmem_limit_bytes=vmem_limit,
        ),
        cost_estimate=cost,
    )(x_bf16, b_all, *w_list)

    return out[:B, :n_out_true]


def init_mlp_params(key, input_size, num_layers, num_channels):
    """Deterministic init mirroring nn.Linear default (U(-1/sqrt(fan_in), ..))."""
    dims = [input_size] + [num_channels] * (num_layers - 1) + [3]
    params = []
    for i in range(len(dims) - 1):
        fan_in, fan_out = dims[i], dims[i + 1]
        key, kw, kb = jax.random.split(key, 3)
        bound = 1.0 / jnp.sqrt(float(fan_in))
        # Stored already transposed: (fan_in, fan_out) == PyTorch weight.T
        w = jax.random.uniform(kw, (fan_in, fan_out), jnp.float32, -bound, bound)
        b = jax.random.uniform(kb, (1, fan_out), jnp.float32, -bound, bound)
        params.append((w, b))
    return params


if __name__ == "__main__":
    key = jax.random.PRNGKey(0)
    input_size = 32
    num_layers = 3      # Linear->ReLU, Linear->ReLU, Linear->Sigmoid
    num_channels = 32
    batch = 8

    kx, kp = jax.random.split(key)
    x = jax.random.normal(kx, (batch, input_size), jnp.float32)
    params = init_mlp_params(kp, input_size, num_layers, num_channels)

    out = mlp_forward(params, x)
    out = jax.block_until_ready(out)
    assert out.shape == (batch, 3)

    # Pure-JAX references:
    #  (a) bf16-matmul reference matching the kernel's compute path (tight),
    #  (b) full-f32 reference matching the original PyTorch module (loose,
    #      accounts for bf16 MXU inputs).
    ref_bf16 = x
    ref_f32 = x
    for i, (w, b) in enumerate(params):
        last = i == len(params) - 1
        yb = jnp.dot(ref_bf16.astype(jnp.bfloat16), w.astype(jnp.bfloat16),
                     preferred_element_type=jnp.float32) + b
        yf = ref_f32 @ w + b
        ref_bf16 = jax.nn.sigmoid(yb) if last else jnp.maximum(yb, 0.0)
        ref_f32 = jax.nn.sigmoid(yf) if last else jnp.maximum(yf, 0.0)

    assert jnp.allclose(out, ref_bf16, atol=1e-3, rtol=1e-3)
    assert jnp.allclose(out, ref_f32, atol=3e-2, rtol=3e-2)

    print("KERNEL_OK")
</pallas_src>

<mosaic_0001>
module attributes {stable_mosaic.version = 11 : i64} {
  func.func @kernel(%arg0: i32, %arg1: memref<8x32xbf16, #tpu.memory_space<vmem>>, %arg2: memref<3x128xf32, #tpu.memory_space<vmem>>, %arg3: memref<32x128xbf16, #tpu.memory_space<vmem>>, %arg4: memref<128x128xbf16, #tpu.memory_space<vmem>>, %arg5: memref<128x128xbf16, #tpu.memory_space<vmem>>, %arg6: memref<8x128xf32, #tpu.memory_space<vmem>>) attributes {dimension_semantics = [#tpu.dimension_semantics<parallel>], iteration_bounds = array<i64: 1>, scalar_prefetch = 0 : i64, scratch_operands = 0 : i64, tpu.core_type = #tpu.core_type<tc>, window_params = [{transform_indices = @transform_0, window_bounds = array<i64: 8, 32>}, {pipeline_mode = #tpu.pipeline_mode<synchronous>, transform_indices = @transform_1, window_bounds = array<i64: 3, 128>}, {pipeline_mode = #tpu.pipeline_mode<synchronous>, transform_indices = @transform_2, window_bounds = array<i64: 32, 128>}, {pipeline_mode = #tpu.pipeline_mode<synchronous>, transform_indices = @transform_3, window_bounds = array<i64: 128, 128>}, {pipeline_mode = #tpu.pipeline_mode<synchronous>, transform_indices = @transform_4, window_bounds = array<i64: 128, 128>}, {transform_indices = @transform_5, window_bounds = array<i64: 8, 128>}]} {
    %c0 = arith.constant 0 : index
    %c0_0 = arith.constant 0 : index
    %0 = vector.load %arg1[%c0, %c0_0] : memref<8x32xbf16, #tpu.memory_space<vmem>>, vector<8x32xbf16>
    %c0_1 = arith.constant 0 : index
    %c0_2 = arith.constant 0 : index
    %1 = vector.load %arg3[%c0_1, %c0_2] : memref<32x128xbf16, #tpu.memory_space<vmem>>, vector<32x128xbf16>
    %cst = arith.constant dense<0.000000e+00> : vector<8x128xf32>
    %2 = tpu.matmul %0, %1, %cst {dimension_numbers = #tpu.dot_dimension_numbers<[1], [0], [0], [1], [0, 0, 1, 1], [], []>} : vector<8x32xbf16>, vector<32x128xbf16>, vector<8x128xf32> -> vector<8x128xf32>
    %c0_3 = arith.constant 0 : index
    %c0_4 = arith.constant 0 : index
    %3 = vector.load %arg2[%c0_3, %c0_4] : memref<3x128xf32, #tpu.memory_space<vmem>>, vector<1x128xf32>
    %4 = vector.broadcast %3 : vector<1x128xf32> to vector<8x128xf32>
    %5 = arith.addf %2, %4 : vector<8x128xf32>
    %cst_5 = arith.constant 0.000000e+00 : f32
    %6 = vector.broadcast %cst_5 : f32 to vector<8x128xf32>
    %7 = arith.maximumf %5, %6 : vector<8x128xf32>
    %8 = arith.truncf %7 : vector<8x128xf32> to vector<8x128xbf16>
    %c0_6 = arith.constant 0 : index
    %c0_7 = arith.constant 0 : index
    %9 = vector.load %arg4[%c0_6, %c0_7] : memref<128x128xbf16, #tpu.memory_space<vmem>>, vector<128x128xbf16>
    %cst_8 = arith.constant dense<0.000000e+00> : vector<8x128xf32>
    %10 = tpu.matmul %8, %9, %cst_8 {dimension_numbers = #tpu.dot_dimension_numbers<[1], [0], [0], [1], [0, 0, 1, 1], [], []>} : vector<8x128xbf16>, vector<128x128xbf16>, vector<8x128xf32> -> vector<8x128xf32>
    %c1 = arith.constant 1 : index
    %c0_9 = arith.constant 0 : index
    %11 = vector.load %arg2[%c1, %c0_9] : memref<3x128xf32, #tpu.memory_space<vmem>>, vector<1x128xf32>
    %12 = vector.broadcast %11 : vector<1x128xf32> to vector<8x128xf32>
    %13 = arith.addf %10, %12 : vector<8x128xf32>
    %cst_10 = arith.constant 0.000000e+00 : f32
    %14 = vector.broadcast %cst_10 : f32 to vector<8x128xf32>
    %15 = arith.maximumf %13, %14 : vector<8x128xf32>
    %16 = arith.truncf %15 : vector<8x128xf32> to vector<8x128xbf16>
    %c0_11 = arith.constant 0 : index
    %c0_12 = arith.constant 0 : index
    %17 = vector.load %arg5[%c0_11, %c0_12] : memref<128x128xbf16, #tpu.memory_space<vmem>>, vector<128x128xbf16>
    %cst_13 = arith.constant dense<0.000000e+00> : vector<8x128xf32>
    %18 = tpu.matmul %16, %17, %cst_13 {dimension_numbers = #tpu.dot_dimension_numbers<[1], [0], [0], [1], [0, 0, 1, 1], [], []>} : vector<8x128xbf16>, vector<128x128xbf16>, vector<8x128xf32> -> vector<8x128xf32>
    %c2 = arith.constant 2 : index
    %c0_14 = arith.constant 0 : index
    %19 = vector.load %arg2[%c2, %c0_14] : memref<3x128xf32, #tpu.memory_space<vmem>>, vector<1x128xf32>
    %20 = vector.broadcast %19 : vector<1x128xf32> to vector<8x128xf32>
    %21 = arith.addf %18, %20 : vector<8x128xf32>
    %22 = arith.negf %21 : vector<8x128xf32>
    %23 = math.exp %22 : vector<8x128xf32>
    %cst_15 = arith.constant 1.000000e+00 : f32
    %24 = vector.broadcast %cst_15 : f32 to vector<8x128xf32>
    %25 = arith.addf %24, %23 : vector<8x128xf32>
    %26 = arith.divf %24, %25 : vector<8x128xf32>
    %c0_16 = arith.constant 0 : index
    %c0_17 = arith.constant 0 : index
    %27 = vector.load %arg6[%c0_16, %c0_17] : memref<8x128xf32, #tpu.memory_space<vmem>>, vector<8x128xf32>
    tpu.vector_store %arg6[%c0_16, %c0_17], %26 {strides = array<i32>} : memref<8x128xf32, #tpu.memory_space<vmem>>, vector<8x128xf32>,
    return
  }
  func.func @transform_0(%arg0: i32) -> (i32, i32) {
    %c0_i32 = arith.constant 0 : i32
    %c0_i32_0 = arith.constant 0 : i32
    return %arg0, %c0_i32 : i32, i32
  }
  func.func @transform_1(%arg0: i32) -> (i32, i32) {
    %c0_i32 = arith.constant 0 : i32
    %c0_i32_0 = arith.constant 0 : i32
    %c0_i32_1 = arith.constant 0 : i32
    return %c0_i32, %c0_i32_0 : i32, i32
  }
  func.func @transform_2(%arg0: i32) -> (i32, i32) {
    %c0_i32 = arith.constant 0 : i32
    %c0_i32_0 = arith.constant 0 : i32
    %c0_i32_1 = arith.constant 0 : i32
    return %c0_i32, %c0_i32_0 : i32, i32
  }
  func.func @transform_3(%arg0: i32) -> (i32, i32) {
    %c0_i32 = arith.constant 0 : i32
    %c0_i32_0 = arith.constant 0 : i32
    %c0_i32_1 = arith.constant 0 : i32
    return %c0_i32, %c0_i32_0 : i32, i32
  }
  func.func @transform_4(%arg0: i32) -> (i32, i32) {
    %c0_i32 = arith.constant 0 : i32
    %c0_i32_0 = arith.constant 0 : i32
    %c0_i32_1 = arith.constant 0 : i32
    return %c0_i32, %c0_i32_0 : i32, i32
  }
  func.func @transform_5(%arg0: i32) -> (i32, i32) {
    %c0_i32 = arith.constant 0 : i32
    %c0_i32_0 = arith.constant 0 : i32
    return %arg0, %c0_i32 : i32, i32
  }
}

</mosaic_0001>

<llo_original>
// kernel: tpu_custom_call.1
$region0: #{tpu_custom_call.1}
  #allocation0 [shape = 'u32[]', space=smem, size = 0x4, offset = 0x4, fixed_abs, tag = 'smem constant byte address 0x4 - core index']
  #allocation1 [shape = 'u32[144,128]{1,0:T(1,128)}', space=vmem, size = 0x12000, scoped, tag = 'internal scratch']
  %s0 = inlined_call_operand.hbm [shape: bf16[8,32], index: 0, kind: input, shape index: {}]
  %s1 = inlined_call_operand.hbm [shape: f32[3,128], index: 1, kind: input, shape index: {}]
  %s2 = inlined_call_operand.hbm [shape: bf16[32,128], index: 2, kind: input, shape index: {}]
  %s3 = inlined_call_operand.hbm [shape: bf16[128,128], index: 3, kind: input, shape index: {}]
  %s4 = inlined_call_operand.hbm [shape: bf16[128,128], index: 4, kind: input, shape index: {}]
  %s5 = inlined_call_operand.hbm [shape: f32[8,128], index: 5, kind: output, shape index: {}]
  %s6 = sld [smem:[#allocation0]]
  $region50: #{tpu_custom_call.1} parent=0
    _
  %s8 = ssub.s32 1, %s6
  %s9 = scalar_select 0, %s8, %s6
  $region1: #{tpu_custom_call.1} parent=0
    #allocation2 [shape = 'u8[2048]{0}', space=vmem, size = 0x800, scoped, tag = 'input window, operand 0, single buffered']
    #allocation3 [shape = 's32[1]{0}', space=sflag, size = 0x4, scoped, tag = 'scoped memory for tpu_custom_call.1']
    #allocation4 [shape = 's32[1]{0}', space=sflag, size = 0x4, scoped, tag = 'scoped memory for tpu_custom_call.1']
    #allocation5 [shape = 'u8[2048]{0}', space=vmem, size = 0x800, scoped, tag = 'input window, operand 1, single buffered']
    #allocation6 [shape = 's32[1]{0}', space=sflag, size = 0x4, scoped, tag = 'scoped memory for tpu_custom_call.1']
    #allocation7 [shape = 'u8[8192]{0}', space=vmem, size = 0x2000, scoped, tag = 'input window, operand 2, single buffered']
    #allocation8 [shape = 'u8[32768]{0}', space=vmem, size = 0x8000, scoped, tag = 'input window, operand 3, single buffered']
    #allocation9 [shape = 's32[1]{0}', space=sflag, size = 0x4, scoped, tag = 'scoped memory for tpu_custom_call.1']
    #allocation10 [shape = 'u8[32768]{0}', space=vmem, size = 0x8000, scoped, tag = 'input window, operand 4, single buffered']
    #allocation11 [shape = 'u8[4096]{0}', space=vmem, size = 0x1000, scoped, tag = 'output window, operand 0, single buffered']
    %10 = vsyncpa [#allocation3], 0
    %11 = vsyncpa [#allocation6], 0
    %12 = vsyncpa [#allocation9], 0
    %13 = vsyncpa [#allocation4], 0
    // Predicated region
    $region2: #{tpu_custom_call.1} parent=1 // pred_check
      _
    $region3: #{tpu_custom_call.1} parent=1 // pred_check_branch
      %15 = sbr.rel (0) target = $region5
    $region4: #{tpu_custom_call.1} parent=1 // pred_region
      %s17 = ssub.s32 64, 64
      %18 = vsyncadd [#allocation3], %s17
      %s20 = sshll.u32 [#allocation2], 4
      %s21 = int_to_ptr.vmem [resolvable:$true] %s20
      %23 = dma.hbm_to_vmem [thread:$0]  %s0, 64, %s21, [#allocation3]
    $region5: #{tpu_custom_call.1} parent=1 // pred_fallthru
      _
    // Predicated region
    $region6: #{tpu_custom_call.1} parent=1 // pred_check
      _
    $region7: #{tpu_custom_call.1} parent=1 // pred_check_branch
      %25 = sbr.rel (0) target = $region9
    $region8: #{tpu_custom_call.1} parent=1 // pred_region
      %s27 = ssub.s32 64, 64
      %28 = vsyncadd [#allocation6], %s27
      %s30 = sshll.u32 [#allocation5], 4
      %s31 = int_to_ptr.vmem [resolvable:$true] %s30
      %33 = dma.hbm_to_vmem [thread:$0]  %s1, 64, %s31, [#allocation6]
    $region9: #{tpu_custom_call.1} parent=1 // pred_fallthru
      _
    // Predicated region
    $region10: #{tpu_custom_call.1} parent=1 // pred_check
      _
    $region11: #{tpu_custom_call.1} parent=1 // pred_check_branch
      %35 = sbr.rel (0) target = $region13
    $region12: #{tpu_custom_call.1} parent=1 // pred_region
      %s37 = ssub.s32 256, 256
      %38 = vsyncadd [#allocation6], %s37
      %s39 = sshll.u32 [#allocation7], 4
      %s40 = int_to_ptr.vmem [resolvable:$true] %s39
      %45 = dma.hbm_to_vmem [thread:$0]  %s2, 256, %s40, [#allocation6], 64, 64, 4
    $region13: #{tpu_custom_call.1} parent=1 // pred_fallthru
      _
    // Predicated region
    $region14: #{tpu_custom_call.1} parent=1 // pred_check
      _
    $region15: #{tpu_custom_call.1} parent=1 // pred_check_branch
      %47 = sbr.rel (0) target = $region17
    $region16: #{tpu_custom_call.1} parent=1 // pred_region
      %s49 = ssub.s32 1024, 1024
      %50 = vsyncadd [#allocation9], %s49
      %s51 = sshll.u32 [#allocation8], 4
      %s52 = int_to_ptr.vmem [resolvable:$true] %s51
      %57 = dma.hbm_to_vmem [thread:$0]  %s3, 1024, %s52, [#allocation9], 64, 64, 4
    $region17: #{tpu_custom_call.1} parent=1 // pred_fallthru
      _
    // Predicated region
    $region18: #{tpu_custom_call.1} parent=1 // pred_check
      _
    $region19: #{tpu_custom_call.1} parent=1 // pred_check_branch
      %59 = sbr.rel (0) target = $region21
    $region20: #{tpu_custom_call.1} parent=1 // pred_region
      %s61 = ssub.s32 1024, 1024
      %62 = vsyncadd [#allocation9], %s61
      %s63 = sshll.u32 [#allocation10], 4
      %s64 = int_to_ptr.vmem [resolvable:$true] %s63
      %69 = dma.hbm_to_vmem [thread:$0]  %s4, 1024, %s64, [#allocation9], 64, 64, 4
    $region21: #{tpu_custom_call.1} parent=1 // pred_fallthru
      _
    // Predicated region
    $region22: #{tpu_custom_call.1} parent=1 // pred_check
      _
    $region23: #{tpu_custom_call.1} parent=1 // pred_check_branch
      %71 = sbr.rel (0) target = $region25
    $region24: #{tpu_custom_call.1} parent=1 // pred_region
      %72 = dma.done [#allocation3], 64
    $region25: #{tpu_custom_call.1} parent=1 // pred_fallthru
      _
    // Predicated region
    $region26: #{tpu_custom_call.1} parent=1 // pred_check
      _
    $region27: #{tpu_custom_call.1} parent=1 // pred_check_branch
      %74 = sbr.rel (0) target = $region29
    $region28: #{tpu_custom_call.1} parent=1 // pred_region
      %75 = dma.done [#allocation6], 64
    $region29: #{tpu_custom_call.1} parent=1 // pred_fallthru
      _
    // Predicated region
    $region30: #{tpu_custom_call.1} parent=1 // pred_check
      _
    $region31: #{tpu_custom_call.1} parent=1 // pred_check_branch
      %77 = sbr.rel (0) target = $region33
    $region32: #{tpu_custom_call.1} parent=1 // pred_region
      %78 = dma.done [#allocation6], 256
    $region33: #{tpu_custom_call.1} parent=1 // pred_fallthru
      _
    // Predicated region
    $region34: #{tpu_custom_call.1} parent=1 // pred_check
      _
    $region35: #{tpu_custom_call.1} parent=1 // pred_check_branch
      %80 = sbr.rel (0) target = $region37
    $region36: #{tpu_custom_call.1} parent=1 // pred_region
      %81 = dma.done [#allocation9], 1024
    $region37: #{tpu_custom_call.1} parent=1 // pred_fallthru
      _
    // Predicated region
    $region38: #{tpu_custom_call.1} parent=1 // pred_check
      _
    $region39: #{tpu_custom_call.1} parent=1 // pred_check_branch
      %83 = sbr.rel (0) target = $region41
    $region40: #{tpu_custom_call.1} parent=1 // pred_region
      %84 = dma.done [#allocation9], 1024
    $region41: #{tpu_custom_call.1} parent=1 // pred_fallthru
      _
    %v86 = vld [vmem:[#allocation2] sm:$0xf]
    %v87 = vld [vmem:[#allocation7] sm:$0xf]
    %v88 = vld [vmem:[#allocation7 + $0x4] sm:$0xf]
    %v89 = vld [vmem:[#allocation7 + $0x8] sm:$0xf]
    %v90 = vld [vmem:[#allocation7 + $0xc] sm:$0xf]
    %v91 = vld [vmem:[#allocation5] sm:$0x1]
    %v92 = vlaneseq
    %v93 = vshrl.u32 %v92, 7
    %v94 = vsub.s32 0, %v93
    %v95 = vrot.slane %v91, %v94
    %v100 = vunpack.c.l.b16 %v87
    %v101 = vunpack.c.l.b16 %v88
    %v102 = vunpack.c.l.b16 %v89
    %v103 = vunpack.c.l.b16 %v90
    %v104 = vpack.c.b16 %v101, %v100
    %v105 = vpack.c.b16 %v103, %v102
    %vm108 = vcmask 261120
    %v110 = vsel %vm108, %v86, 0
    %112 = vmatprep.subr.bf16.mxu0 0
    %113 = vmatpush1.bf16.msra.mxu0 %v104
    %114 = vmatprep.subr.bf16.mxu0 0
    %115 = vmatpush1.bf16.msra.mxu0 %v105
    %116 = vmatprep.subr.bf16.mxu0 0
    %117 = vmatpush1.bf16.msra.mxu0 0
    %118 = vmatprep.subr.bf16.mxu0 0
    %119 = vmatpush1.bf16.msra.mxu0 0
    %120 = vmatprep.subr.bf16.mxu0 0
    %121 = vmatpush1.bf16.msra.mxu0 0
    %122 = vmatprep.subr.bf16.mxu0 0
    %123 = vmatpush1.bf16.msra.mxu0 0
    %124 = vmatprep.subr.bf16.mxu0 0
    %125 = vmatpush1.bf16.msra.mxu0 0
    %126 = vmatprep.subr.bf16.mxu0 0
    %127 = vmatpush1.bf16.msra.mxu0 0
    %128 = vmatprep.subr.bf16.mxu0 0
    %129 = vmatpush1.bf16.msra.mxu0 0
    %130 = vmatprep.subr.bf16.mxu0 0
    %131 = vmatpush1.bf16.msra.mxu0 0
    %132 = vmatprep.subr.bf16.mxu0 0
    %133 = vmatpush1.bf16.msra.mxu0 0
    %134 = vmatprep.subr.bf16.mxu0 0
    %135 = vmatpush1.bf16.msra.mxu0 0
    %136 = vmatprep.subr.bf16.mxu0 0
    %137 = vmatpush1.bf16.msra.mxu0 0
    %138 = vmatprep.subr.bf16.mxu0 0
    %139 = vmatpush1.bf16.msra.mxu0 0
    %140 = vmatprep.subr.bf16.mxu0 0
    %141 = vmatpush1.bf16.msra.mxu0 0
    %142 = vmatprep.subr.bf16.mxu0 0
    %143 = vmatpush1.bf16.msra.mxu0 0
    %144 = vmatprep.mubr.bf16.mxu0 0
    %145 = vmatmul.mubr.bf16.gmra.mrb[0].mxu0 %v110
    %v146 = vpop.f32.mrb[0].mxu0
    %v147 = vadd.f32 %v95, %v146
    %v148 = vpop.f32.mrb[0].mxu0
    %v149 = vpop.f32.mrb[0].mxu0
    %v150 = vpop.f32.mrb[0].mxu0
    %151 = vdwg.mxu0
    %v152 = vmax.f32 %v147, 0.0
    %v153 = vpack.c.bf16 %v152, %v152
    %v154 = vld [vmem:[#allocation8] sm:$0xf]
    %v155 = vld [vmem:[#allocation8 + $0x4] sm:$0xf]
    %v156 = vld [vmem:[#allocation8 + $0x8] sm:$0xf]
    %v157 = vld [vmem:[#allocation8 + $0xc] sm:$0xf]
    %v158 = vld [vmem:[#allocation8 + $0x10] sm:$0xf]
    %v159 = vld [vmem:[#allocation8 + $0x14] sm:$0xf]
    %v160 = vld [vmem:[#allocation8 + $0x18] sm:$0xf]
    %v161 = vld [vmem:[#allocation8 + $0x1c] sm:$0xf]
    %v162 = vld [vmem:[#allocation8 + $0x20] sm:$0xf]
    %v163 = vld [vmem:[#allocation8 + $0x24] sm:$0xf]
    %v164 = vld [vmem:[#allocation8 + $0x28] sm:$0xf]
    %v165 = vld [vmem:[#allocation8 + $0x2c] sm:$0xf]
    %v166 = vld [vmem:[#allocation8 + $0x30] sm:$0xf]
    %v167 = vld [vmem:[#allocation8 + $0x34] sm:$0xf]
    %v168 = vld [vmem:[#allocation8 + $0x38] sm:$0xf]
    %v169 = vld [vmem:[#allocation8 + $0x3c] sm:$0xf]
    %v170 = vld [vmem:[#allocation5 + $0x1] sm:$0x1]
    %v171 = vlaneseq
    %v172 = vshrl.u32 %v171, 7
    %v173 = vsub.s32 0, %v172
    %v174 = vrot.slane %v170, %v173
    %v191 = vunpack.c.l.b16 %v154
    %v192 = vunpack.c.l.b16 %v155
    %v193 = vunpack.c.l.b16 %v156
    %v194 = vunpack.c.l.b16 %v157
    %v195 = vunpack.c.l.b16 %v158
    %v196 = vunpack.c.l.b16 %v159
    %v197 = vunpack.c.l.b16 %v160
    %v198 = vunpack.c.l.b16 %v161
    %v199 = vunpack.c.l.b16 %v162
    %v200 = vunpack.c.l.b16 %v163
    %v201 = vunpack.c.l.b16 %v164
    %v202 = vunpack.c.l.b16 %v165
    %v203 = vunpack.c.l.b16 %v166
    %v204 = vunpack.c.l.b16 %v167
    %v205 = vunpack.c.l.b16 %v168
    %v206 = vunpack.c.l.b16 %v169
    %v207 = vpack.c.b16 %v192, %v191
    %v208 = vpack.c.b16 %v194, %v193
    %v209 = vpack.c.b16 %v196, %v195
    %v210 = vpack.c.b16 %v198, %v197
    %v211 = vpack.c.b16 %v200, %v199
    %v212 = vpack.c.b16 %v202, %v201
    %v213 = vpack.c.b16 %v204, %v203
    %v214 = vpack.c.b16 %v206, %v205
    %223 = vmatprep.subr.bf16.mxu0 0
    %224 = vmatpush1.bf16.msra.mxu0 %v207
    %225 = vmatprep.subr.bf16.mxu0 0
    %226 = vmatpush1.bf16.msra.mxu0 %v208
    %227 = vmatprep.subr.bf16.mxu0 0
    %228 = vmatpush1.bf16.msra.mxu0 %v209
    %229 = vmatprep.subr.bf16.mxu0 0
    %230 = vmatpush1.bf16.msra.mxu0 %v210
    %231 = vmatprep.subr.bf16.mxu0 0
    %232 = vmatpush1.bf16.msra.mxu0 %v211
    %233 = vmatprep.subr.bf16.mxu0 0
    %234 = vmatpush1.bf16.msra.mxu0 %v212
    %235 = vmatprep.subr.bf16.mxu0 0
    %236 = vmatpush1.bf16.msra.mxu0 %v213
    %237 = vmatprep.subr.bf16.mxu0 0
    %238 = vmatpush1.bf16.msra.mxu0 %v214
    %239 = vmatprep.subr.bf16.mxu0 0
    %240 = vmatpush1.bf16.msra.mxu0 0
    %241 = vmatprep.subr.bf16.mxu0 0
    %242 = vmatpush1.bf16.msra.mxu0 0
    %243 = vmatprep.subr.bf16.mxu0 0
    %244 = vmatpush1.bf16.msra.mxu0 0
    %245 = vmatprep.subr.bf16.mxu0 0
    %246 = vmatpush1.bf16.msra.mxu0 0
    %247 = vmatprep.subr.bf16.mxu0 0
    %248 = vmatpush1.bf16.msra.mxu0 0
    %249 = vmatprep.subr.bf16.mxu0 0
    %250 = vmatpush1.bf16.msra.mxu0 0
    %251 = vmatprep.subr.bf16.mxu0 0
    %252 = vmatpush1.bf16.msra.mxu0 0
    %253 = vmatprep.subr.bf16.mxu0 0
    %254 = vmatpush1.bf16.msra.mxu0 0
    %255 = vmatprep.mubr.bf16.mxu0 0
    %256 = vmatmul.mubr.bf16.gmra.mrb[0].mxu0 %v153
    %v257 = vpop.f32.mrb[0].mxu0
    %v258 = vadd.f32 %v174, %v257
    %v259 = vpop.f32.mrb[0].mxu0
    %v260 = vpop.f32.mrb[0].mxu0
    %v261 = vpop.f32.mrb[0].mxu0
    %262 = vdwg.mxu0
    %v263 = vmax.f32 %v258, 0.0
    %v264 = vpack.c.bf16 %v263, %v263
    %v265 = vld [vmem:[#allocation10] sm:$0xf]
    %v266 = vld [vmem:[#allocation10 + $0x4] sm:$0xf]
    %v267 = vld [vmem:[#allocation10 + $0x8] sm:$0xf]
    %v268 = vld [vmem:[#allocation10 + $0xc] sm:$0xf]
    %v269 = vld [vmem:[#allocation10 + $0x10] sm:$0xf]
    %v270 = vld [vmem:[#allocation10 + $0x14] sm:$0xf]
    %v271 = vld [vmem:[#allocation10 + $0x18] sm:$0xf]
    %v272 = vld [vmem:[#allocation10 + $0x1c] sm:$0xf]
    %v273 = vld [vmem:[#allocation10 + $0x20] sm:$0xf]
    %v274 = vld [vmem:[#allocation10 + $0x24] sm:$0xf]
    %v275 = vld [vmem:[#allocation10 + $0x28] sm:$0xf]
    %v276 = vld [vmem:[#allocation10 + $0x2c] sm:$0xf]
    %v277 = vld [vmem:[#allocation10 + $0x30] sm:$0xf]
    %v278 = vld [vmem:[#allocation10 + $0x34] sm:$0xf]
    %v279 = vld [vmem:[#allocation10 + $0x38] sm:$0xf]
    %v280 = vld [vmem:[#allocation10 + $0x3c] sm:$0xf]
    %v281 = vld [vmem:[#allocation5 + $0x2] sm:$0x1]
    %v282 = vlaneseq
    %v283 = vshrl.u32 %v282, 7
    %v284 = vsub.s32 0, %v283
    %v285 = vrot.slane %v281, %v284
    %v302 = vunpack.c.l.b16 %v265
    %v303 = vunpack.c.l.b16 %v266
    %v304 = vunpack.c.l.b16 %v267
    %v305 = vunpack.c.l.b16 %v268
    %v306 = vunpack.c.l.b16 %v269
    %v307 = vunpack.c.l.b16 %v270
    %v308 = vunpack.c.l.b16 %v271
    %v309 = vunpack.c.l.b16 %v272
    %v310 = vunpack.c.l.b16 %v273
    %v311 = vunpack.c.l.b16 %v274
    %v312 = vunpack.c.l.b16 %v275
    %v313 = vunpack.c.l.b16 %v276
    %v314 = vunpack.c.l.b16 %v277
    %v315 = vunpack.c.l.b16 %v278
    %v316 = vunpack.c.l.b16 %v279
    %v317 = vunpack.c.l.b16 %v280
    %v318 = vpack.c.b16 %v303, %v302
    %v319 = vpack.c.b16 %v305, %v304
    %v320 = vpack.c.b16 %v307, %v306
    %v321 = vpack.c.b16 %v309, %v308
    %v322 = vpack.c.b16 %v311, %v310
    %v323 = vpack.c.b16 %v313, %v312
    %v324 = vpack.c.b16 %v315, %v314
    %v325 = vpack.c.b16 %v317, %v316
    %334 = vmatprep.subr.bf16.mxu0 0
    %335 = vmatpush1.bf16.msra.mxu0 %v318
    %336 = vmatprep.subr.bf16.mxu0 0
    %337 = vmatpush1.bf16.msra.mxu0 %v319
    %338 = vmatprep.subr.bf16.mxu0 0
    %339 = vmatpush1.bf16.msra.mxu0 %v320
    %340 = vmatprep.subr.bf16.mxu0 0
    %341 = vmatpush1.bf16.msra.mxu0 %v321
    %342 = vmatprep.subr.bf16.mxu0 0
    %343 = vmatpush1.bf16.msra.mxu0 %v322
    %344 = vmatprep.subr.bf16.mxu0 0
    %345 = vmatpush1.bf16.msra.mxu0 %v323
    %346 = vmatprep.subr.bf16.mxu0 0
    %347 = vmatpush1.bf16.msra.mxu0 %v324
    %348 = vmatprep.subr.bf16.mxu0 0
    %349 = vmatpush1.bf16.msra.mxu0 %v325
    %350 = vmatprep.subr.bf16.mxu0 0
    %351 = vmatpush1.bf16.msra.mxu0 0
    %352 = vmatprep.subr.bf16.mxu0 0
    %353 = vmatpush1.bf16.msra.mxu0 0
    %354 = vmatprep.subr.bf16.mxu0 0
    %355 = vmatpush1.bf16.msra.mxu0 0
    %356 = vmatprep.subr.bf16.mxu0 0
    %357 = vmatpush1.bf16.msra.mxu0 0
    %358 = vmatprep.subr.bf16.mxu0 0
    %359 = vmatpush1.bf16.msra.mxu0 0
    %360 = vmatprep.subr.bf16.mxu0 0
    %361 = vmatpush1.bf16.msra.mxu0 0
    %362 = vmatprep.subr.bf16.mxu0 0
    %363 = vmatpush1.bf16.msra.mxu0 0
    %364 = vmatprep.subr.bf16.mxu0 0
    %365 = vmatpush1.bf16.msra.mxu0 0
    %366 = vmatprep.mubr.bf16.mxu0 0
    %367 = vmatmul.mubr.bf16.gmra.mrb[0].mxu0 %v264
    %v368 = vpop.f32.mrb[0].mxu0
    %v369 = vadd.f32 %v285, %v368
    %v370 = vpop.f32.mrb[0].mxu0
    %v371 = vpop.f32.mrb[0].mxu0
    %v372 = vpop.f32.mrb[0].mxu0
    %373 = vdwg.mxu0
    %v374 = vxor.u32 %v369, 2147483648
    %v375 = vmul.f32 %v374, 1.442695
    %v376 = vpow.pop %v375
    %v377 = vadd.f32 %v376, 1.0
    %v378 = vrcp.pop %v377
    %v379 = vmul.f32 1.0, %v378
    %380 = vst [vmem:[#allocation11] sm:$0xff] %v379
    // Predicated region
    $region42: #{tpu_custom_call.1} parent=1 // pred_check
      _
    $region43: #{tpu_custom_call.1} parent=1 // pred_check_branch
      %382 = sbr.rel (0) target = $region45
    $region44: #{tpu_custom_call.1} parent=1 // pred_region
      %s384 = ssub.s32 128, 128
      %385 = vsyncadd [#allocation4], %s384
      %s387 = sshll.u32 [#allocation11], 4
      %s388 = int_to_ptr.vmem [resolvable:$true] %s387
      %390 = dma.vmem_to_hbm [thread:$0]  %s388, 128, %s5, [#allocation4]
    $region45: #{tpu_custom_call.1} parent=1 // pred_fallthru
      _
    // Predicated region
    $region46: #{tpu_custom_call.1} parent=1 // pred_check
      _
    $region47: #{tpu_custom_call.1} parent=1 // pred_check_branch
      %392 = sbr.rel (0) target = $region49
    $region48: #{tpu_custom_call.1} parent=1 // pred_region
      %393 = dma.done [#allocation4], 128
    $region49: #{tpu_custom_call.1} parent=1 // pred_fallthru
      _
    %394 = vsyncpa [#allocation3], 1
    %395 = vsyncpa [#allocation6], 1
    %396 = vsyncpa [#allocation9], 1
    %397 = vsyncpa [#allocation4], 1

</llo_original>
